<compile_context>
chip_gen: v7x
topology: tpu7x:2x2x1
jax: 0.10.0
libtpu: 0.0.40
codegen_flags: <defaults>
</compile_context>

<pallas_src>
import jax
import jax.numpy as jnp
from jax.experimental import pallas as pl
from jax.experimental.pallas import tpu as pltpu


def _make_graphconv_kernel(bt, fuse_fc_first, mm_dtype):
    """Builds a kernel processing `bt` graphs per grid step."""

    def kernel(x_ref, a_ref, m_ref, wt_ref, b_ref, out_ref):
        # x_ref:  (Bt, N, Fin)      a_ref: (Bt, N, N)     m_ref: (Bt, 1, N)
        # wt_ref: (Fin, Fout_pad)   b_ref: (1, Fout_pad)  out_ref: (Bt, N, Fout_pad)
        wt_mm = wt_ref[...].astype(mm_dtype)          # hoisted out of the loop
        b = b_ref[...].astype(jnp.float32)            # (1, Fout_pad)

        for g in range(bt):                           # static unroll (Bt small)
            x = x_ref[g].astype(jnp.float32)          # (N, Fin)
            A = a_ref[g].astype(jnp.float32)          # (N, N)
            m_row = m_ref[g].astype(jnp.float32)      # (1, N)

            # Degrees of A_hat = A + I: column sums of A plus exactly 1 per col.
            d = jnp.sum(A, axis=0, keepdims=True) + 1.0       # (1, N)
            dh_row = jax.lax.rsqrt(d + 1e-5)                   # (1, N)
            dh_col = jnp.transpose(dh_row)                     # (N, 1)
            m_col = jnp.transpose(m_row)                       # (N, 1)

            if fuse_fc_first:
                # (L @ x) @ W^T == L @ (x @ W^T): do the narrow FC first.
                xw = jnp.dot(x.astype(mm_dtype), wt_mm,
                             preferred_element_type=jnp.float32)   # (N, Fout_pad)
                xd = dh_col * xw
                ax = jnp.dot(A.astype(mm_dtype), xd.astype(mm_dtype),
                             preferred_element_type=jnp.float32)
                out = dh_col * (ax + xd) + b
            else:
                xd = dh_col * x                                     # D^-1/2 x
                ax = jnp.dot(A.astype(mm_dtype), xd.astype(mm_dtype),
                             preferred_element_type=jnp.float32)    # A @ xd
                xl = dh_col * (ax + xd)                             # L @ x
                out = jnp.dot(xl.astype(mm_dtype), wt_mm,
                              preferred_element_type=jnp.float32) + b

            out_ref[g] = (out * m_col).astype(out_ref.dtype)

    return kernel


def _choose_bt(B, N, Fin, Fout_pad, itemsize, vmem_budget_bytes):
    """Graphs per grid step: biggest divisor of B that fits the VMEM budget,
    keeps >= 2 grid steps (v7x megacore) and a modest static unroll."""
    per_graph = (N * N + N * Fin + N * Fout_pad + N) * itemsize * 2  # dbl-buffered
    cap = max(1, int(vmem_budget_bytes // max(per_graph, 1)))
    if B >= 2:
        cap = min(cap, max(1, B // 2))
    cap = min(cap, 8)
    bt = 1
    for cand in range(1, B + 1):
        if B % cand == 0 and cand <= cap:
            bt = cand
    return bt


def graph_conv(x, A, mask, W, bias, *, matmul_dtype=jnp.bfloat16,
               vmem_budget_bytes=8 << 20):
    """x: (B,N,Fin), A: (B,N,N), mask: (B,N) or (B,N,1),
    W: (Fout,Fin) (PyTorch layout), bias: (Fout,).
    Returns (out, A_unsq, mask_unsq) mirroring the PyTorch module."""
    B, N, Fin = x.shape
    Fout = W.shape[0]
    assert A.shape == (B, N, N)

    mask3 = mask[:, :, None] if mask.ndim == 2 else mask          # module output
    mask_rows = mask3[:, :, 0].reshape(B, 1, N).astype(x.dtype)   # lane-dense feed

    # Lane-dense output: pad the FC output width to a multiple of 128.
    Fout_pad = ((Fout + 127) // 128) * 128
    Wt = jnp.transpose(W).astype(x.dtype)                          # (Fin, Fout)
    if Fout_pad != Fout:
        Wt = jnp.pad(Wt, ((0, 0), (0, Fout_pad - Fout)))
        b2 = jnp.pad(bias, (0, Fout_pad - Fout))
    else:
        b2 = bias
    b2 = b2.reshape(1, Fout_pad).astype(jnp.float32)

    itemsize = jnp.dtype(x.dtype).itemsize
    Bt = _choose_bt(B, N, Fin, Fout_pad, itemsize, vmem_budget_bytes)
    fuse_fc_first = Fout_pad < Fin   # pick the cheaper matmul order at trace time

    out_pad = pl.pallas_call(
        _make_graphconv_kernel(Bt, fuse_fc_first, matmul_dtype),
        out_shape=jax.ShapeDtypeStruct((B, N, Fout_pad), x.dtype),
        grid_spec=pltpu.PrefetchScalarGridSpec(
            num_scalar_prefetch=0,
            grid=(B // Bt,),
            in_specs=[
                pl.BlockSpec((Bt, N, Fin), lambda b: (b, 0, 0)),
                pl.BlockSpec((Bt, N, N), lambda b: (b, 0, 0)),
                pl.BlockSpec((Bt, 1, N), lambda b: (b, 0, 0)),
                pl.BlockSpec((Fin, Fout_pad), lambda b: (0, 0)),
                pl.BlockSpec((1, Fout_pad), lambda b: (0, 0)),
            ],
            out_specs=pl.BlockSpec((Bt, N, Fout_pad), lambda b: (b, 0, 0)),
        ),
        compiler_params=pltpu.CompilerParams(
            dimension_semantics=("parallel",)),
    )(x, A, mask_rows, Wt, b2)

    out = out_pad[:, :, :Fout] if Fout_pad != Fout else out_pad
    A_unsq = A[:, :, :, None]           # module does A.unsqueeze(3)
    return out, A_unsq, mask3


def graph_conv_ref(x, A, mask, W, bias):
    """Pure-JAX reference of the PyTorch forward (K=1, n_relations=1)."""
    B, N, _ = A.shape
    hi = jax.lax.Precision.HIGHEST
    eye = jnp.eye(N, dtype=A.dtype)[None]
    A_hat = A + eye
    D_hat = (jnp.sum(A_hat, axis=1) + 1e-5) ** (-0.5)
    L = D_hat[:, :, None] * A_hat * D_hat[:, None, :]
    xl = jnp.einsum("bij,bjf->bif", L, x, precision=hi)
    out = jnp.einsum("bif,of->bio", xl, W, precision=hi) + bias[None, None, :]
    m = mask[:, :, None] if mask.ndim == 2 else mask
    return out * m


if __name__ == "__main__":
    key = jax.random.PRNGKey(0)
    k_x, k_a, k_m, k_w, k_b = jax.random.split(key, 5)

    B, N, Fin, Fout = 2, 16, 8, 32

    x = jax.random.normal(k_x, (B, N, Fin), dtype=jnp.float32)
    # symmetric non-negative adjacency
    A_raw = jax.random.uniform(k_a, (B, N, N), dtype=jnp.float32)
    A = (A_raw + jnp.transpose(A_raw, (0, 2, 1))) * 0.5
    mask = (jax.random.uniform(k_m, (B, N)) > 0.2).astype(jnp.float32)

    # Deterministic "Linear(in=Fin*K*n_rel, out=Fout)" params (PyTorch-style uniform init)
    bound = 1.0 / (Fin ** 0.5)
    W = jax.random.uniform(k_w, (Fout, Fin), minval=-bound, maxval=bound,
                           dtype=jnp.float32)
    bias = jax.random.uniform(k_b, (Fout,), minval=-bound, maxval=bound,
                              dtype=jnp.float32)

    ref = graph_conv_ref(x, A, mask, W, bias)

    # Full-precision matmul path: checks the algebraic rewrite tightly.
    out_f32, _, _ = graph_conv(x, A, mask, W, bias, matmul_dtype=jnp.float32)
    out_f32 = jax.block_until_ready(out_f32)
    assert out_f32.shape == (B, N, Fout)
    assert jnp.allclose(out_f32, ref, atol=2e-3, rtol=2e-3), "f32 path mismatch"

    # Default bf16-MXU path (production configuration).
    out, A_out, mask_out = graph_conv(x, A, mask, W, bias)
    out = jax.block_until_ready(out)
    assert out.shape == (B, N, Fout)
    assert A_out.shape == (B, N, N, 1) and mask_out.shape == (B, N, 1)
    assert jnp.allclose(out, ref, atol=4e-2, rtol=4e-2), "bf16 path mismatch"

    print("KERNEL_OK")
</pallas_src>

<mosaic_0001>
module attributes {stable_mosaic.version = 11 : i64} {
  func.func @kernel(%arg0: i32, %arg1: memref<1x16x8xf32, #tpu.memory_space<vmem>>, %arg2: memref<1x16x16xf32, #tpu.memory_space<vmem>>, %arg3: memref<1x1x16xf32, #tpu.memory_space<vmem>>, %arg4: memref<8x128xf32, #tpu.memory_space<vmem>>, %arg5: memref<1x128xf32, #tpu.memory_space<vmem>>, %arg6: memref<1x16x128xf32, #tpu.memory_space<vmem>>) attributes {dimension_semantics = [#tpu.dimension_semantics<parallel>], iteration_bounds = array<i64: 2>, scalar_prefetch = 0 : i64, scratch_operands = 0 : i64, tpu.core_type = #tpu.core_type<tc>, window_params = [{transform_indices = @transform_0, window_bounds = array<i64: 1, 16, 8>}, {transform_indices = @transform_1, window_bounds = array<i64: 1, 16, 16>}, {transform_indices = @transform_2, window_bounds = array<i64: 1, 1, 16>}, {pipeline_mode = #tpu.pipeline_mode<synchronous>, transform_indices = @transform_3, window_bounds = array<i64: 8, 128>}, {pipeline_mode = #tpu.pipeline_mode<synchronous>, transform_indices = @transform_4, window_bounds = array<i64: 1, 128>}, {transform_indices = @transform_5, window_bounds = array<i64: 1, 16, 128>}]} {
    %c0 = arith.constant 0 : index
    %c0_0 = arith.constant 0 : index
    %0 = vector.load %arg4[%c0, %c0_0] : memref<8x128xf32, #tpu.memory_space<vmem>>, vector<8x128xf32>
    %c0_1 = arith.constant 0 : index
    %c0_2 = arith.constant 0 : index
    %1 = vector.load %arg5[%c0_1, %c0_2] : memref<1x128xf32, #tpu.memory_space<vmem>>, vector<1x128xf32>
    %c0_3 = arith.constant 0 : index
    %c0_4 = arith.constant 0 : index
    %c0_5 = arith.constant 0 : index
    %2 = vector.load %arg1[%c0_3, %c0_4, %c0_5] : memref<1x16x8xf32, #tpu.memory_space<vmem>>, vector<1x16x8xf32>
    %3 = vector.shape_cast %2 : vector<1x16x8xf32> to vector<16x8xf32>
    %c0_6 = arith.constant 0 : index
    %c0_7 = arith.constant 0 : index
    %c0_8 = arith.constant 0 : index
    %4 = vector.load %arg2[%c0_6, %c0_7, %c0_8] : memref<1x16x16xf32, #tpu.memory_space<vmem>>, vector<1x16x16xf32>
    %5 = vector.shape_cast %4 : vector<1x16x16xf32> to vector<16x16xf32>
    %c0_9 = arith.constant 0 : index
    %c0_10 = arith.constant 0 : index
    %c0_11 = arith.constant 0 : index
    %6 = vector.load %arg3[%c0_9, %c0_10, %c0_11] : memref<1x1x16xf32, #tpu.memory_space<vmem>>, vector<1x1x16xf32>
    %7 = vector.shape_cast %6 : vector<1x1x16xf32> to vector<1x16xf32>
    %cst = arith.constant dense<0.000000e+00> : vector<16xf32>
    %8 = vector.multi_reduction <add>, %5, %cst [0] : vector<16x16xf32> to vector<16xf32>
    %9 = vector.shape_cast %8 : vector<16xf32> to vector<1x16xf32>
    %cst_12 = arith.constant 1.000000e+00 : f32
    %10 = vector.broadcast %cst_12 : f32 to vector<1x16xf32>
    %11 = arith.addf %9, %10 : vector<1x16xf32>
    %cst_13 = arith.constant 9.99999974E-6 : f32
    %12 = vector.broadcast %cst_13 : f32 to vector<1x16xf32>
    %13 = arith.addf %11, %12 : vector<1x16xf32>
    %14 = math.rsqrt %13 : vector<1x16xf32>
    %15 = tpu.transpose %14, [1, 0] : vector<1x16xf32> -> vector<16x1xf32>
    %16 = tpu.transpose %7, [1, 0] : vector<1x16xf32> -> vector<16x1xf32>
    %17 = vector.broadcast %15 : vector<16x1xf32> to vector<16x8xf32>
    %18 = arith.mulf %17, %3 : vector<16x8xf32>
    %cst_14 = arith.constant dense<0.000000e+00> : vector<16x8xf32>
    %19 = tpu.matmul %5, %18, %cst_14 {dimension_numbers = #tpu.dot_dimension_numbers<[1], [0], [0], [1], [0, 0, 1, 1], [], []>} : vector<16x16xf32>, vector<16x8xf32>, vector<16x8xf32> -> vector<16x8xf32>
    %20 = arith.addf %19, %18 : vector<16x8xf32>
    %21 = vector.broadcast %15 : vector<16x1xf32> to vector<16x8xf32>
    %22 = arith.mulf %21, %20 : vector<16x8xf32>
    %cst_15 = arith.constant dense<0.000000e+00> : vector<16x128xf32>
    %23 = tpu.matmul %22, %0, %cst_15 {dimension_numbers = #tpu.dot_dimension_numbers<[1], [0], [0], [1], [0, 0, 1, 1], [], []>} : vector<16x8xf32>, vector<8x128xf32>, vector<16x128xf32> -> vector<16x128xf32>
    %24 = vector.broadcast %1 : vector<1x128xf32> to vector<16x128xf32>
    %25 = arith.addf %23, %24 : vector<16x128xf32>
    %26 = vector.broadcast %16 : vector<16x1xf32> to vector<16x128xf32>
    %27 = arith.mulf %25, %26 : vector<16x128xf32>
    %c0_16 = arith.constant 0 : index
    %c0_17 = arith.constant 0 : index
    %c0_18 = arith.constant 0 : index
    %28 = vector.load %arg6[%c0_16, %c0_17, %c0_18] : memref<1x16x128xf32, #tpu.memory_space<vmem>>, vector<1x16x128xf32>
    %29 = vector.shape_cast %28 : vector<1x16x128xf32> to vector<16x128xf32>
    %30 = vector.shape_cast %27 : vector<16x128xf32> to vector<1x16x128xf32>
    tpu.vector_store %arg6[%c0_16, %c0_17, %c0_18], %30 {strides = array<i32>} : memref<1x16x128xf32, #tpu.memory_space<vmem>>, vector<1x16x128xf32>,
    return
  }
  func.func @transform_0(%arg0: i32) -> (i32, i32, i32) {
    %c0_i32 = arith.constant 0 : i32
    %c0_i32_0 = arith.constant 0 : i32
    %c0_i32_1 = arith.constant 0 : i32
    return %arg0, %c0_i32, %c0_i32_0 : i32, i32, i32
  }
  func.func @transform_1(%arg0: i32) -> (i32, i32, i32) {
    %c0_i32 = arith.constant 0 : i32
    %c0_i32_0 = arith.constant 0 : i32
    %c0_i32_1 = arith.constant 0 : i32
    return %arg0, %c0_i32, %c0_i32_0 : i32, i32, i32
  }
  func.func @transform_2(%arg0: i32) -> (i32, i32, i32) {
    %c0_i32 = arith.constant 0 : i32
    %c0_i32_0 = arith.constant 0 : i32
    %c0_i32_1 = arith.constant 0 : i32
    return %arg0, %c0_i32, %c0_i32_0 : i32, i32, i32
  }
  func.func @transform_3(%arg0: i32) -> (i32, i32) {
    %c0_i32 = arith.constant 0 : i32
    %c0_i32_0 = arith.constant 0 : i32
    %c0_i32_1 = arith.constant 0 : i32
    return %c0_i32, %c0_i32_0 : i32, i32
  }
  func.func @transform_4(%arg0: i32) -> (i32, i32) {
    %c0_i32 = arith.constant 0 : i32
    %c0_i32_0 = arith.constant 0 : i32
    %c0_i32_1 = arith.constant 0 : i32
    return %c0_i32, %c0_i32_0 : i32, i32
  }
  func.func @transform_5(%arg0: i32) -> (i32, i32, i32) {
    %c0_i32 = arith.constant 0 : i32
    %c0_i32_0 = arith.constant 0 : i32
    %c0_i32_1 = arith.constant 0 : i32
    return %arg0, %c0_i32, %c0_i32_0 : i32, i32, i32
  }
}

</mosaic_0001>

<llo_original>
// kernel: tpu_custom_call.1
$region0: #{tpu_custom_call.1}
  #allocation0 [shape = 'u32[]', space=smem, size = 0x4, offset = 0x4, fixed_abs, tag = 'smem constant byte address 0x4 - core index']
  #allocation1 [shape = 'u32[144,128]{1,0:T(1,128)}', space=vmem, size = 0x12000, scoped, tag = 'internal scratch']
  %s0 = inlined_call_operand.vmem [shape: f32[2,16,8], index: 0, kind: input, shape index: {}]
  %s1 = inlined_call_operand.vmem [shape: f32[2,16,16], index: 1, kind: input, shape index: {}]
  %s2 = inlined_call_operand.vmem [shape: f32[2,1,16], index: 2, kind: input, shape index: {}]
  %s3 = inlined_call_operand.vmem [shape: f32[8,128], index: 3, kind: input, shape index: {}]
  %s4 = inlined_call_operand.vmem [shape: f32[1,128], index: 4, kind: input, shape index: {}]
  %s5 = inlined_call_operand.hbm [shape: f32[2,16,128], index: 5, kind: output, shape index: {}]
  %s6 = sld [smem:[#allocation0]]
  $region53: #{tpu_custom_call.1} parent=0
    _
  %s8 = ssub.s32 1, %s6
  %s9 = scalar_select 0, %s8, %s6
  $region1: #{tpu_custom_call.1} parent=0
    #allocation2 [shape = 'u8[16384]{0}', space=vmem, size = 0x4000, scoped, tag = 'output window, operand 0']
    #allocation3 [shape = 's32[2]{0}', space=sflag, size = 0x8, scoped, tag = 'scoped memory for tpu_custom_call.1']
    %10 = vsyncpa [#allocation3], 0
    %s11 = scalar_lea.sflag [#allocation3], 1
    %12 = vsyncpa %s11, 0
    loop: start=0, step=1, limit=4
    $region2: #{tpu_custom_call.1} parent=1 // loop_pre_header
      _
    $region3: #{tpu_custom_call.1} parent=1 // loop_header
      %s14 = sphi 0, %s18
      %p15 = scmp.ge.s32.totalorder %s14, 4
      %s24 = sphi 0, %s26
      %s27 = sphi 0, %s24
      %s28 = sphi 0, %s27
      %s44 = sphi 0, %s28
      %s50 = sphi 0, %s52
      %s53 = sphi 0, %s50
      %s54 = sphi 0, %s53
      %s70 = sphi 0, %s54
      %s76 = sphi 0, %s78
      %s79 = sphi 0, %s76
      %s80 = sphi 0, %s79
      %s96 = sphi 0, %s80
      %s100 = sphi 0, %s100
      %s102 = sphi 0, %s100
      %s103 = sphi 0, %s102
      %s117 = sphi 0, %s103
      %s121 = sphi 0, %s121
      %s123 = sphi 0, %s121
      %s124 = sphi 0, %s123
      %s138 = sphi 0, %s124
      %s144 = sphi 0, %s146
      %s147 = sphi 0, %s144
      %s148 = sphi 0, %s147
      %s164 = sphi 0, %s148
    $region4: #{tpu_custom_call.1} parent=1 // loop_header_branch
      %17 = sbr.rel (%p15) target = $region8
    $region5: #{tpu_custom_call.1} parent=1 // loop_body
      %s19 = ssub.s32 %s14, 1
      %s20 = ssub.s32 %s14, 2
      %s21 = sadd.s32 %s14, 1
      %s22 = ssub.s32 %s14, %s21
      %p23 = scmp.eq.s32.totalorder %s22, 0
      %s25 = sadd.s32 %s24, 1
      %s26 = scalar_select %p23, %s24, %s25
      %p29 = pneg %p23
      %p30 = scmp.eq.s32.totalorder %s14, 1
      %p31 = por %p29, %p30
      %p32 = scmp.ne.s32.totalorder %s24, %s27
      %p33 = scmp.eq.s32.totalorder %s14, 0
      %p34 = por %p32, %p33
      %p35 = scmp.ne.s32.totalorder %s24, %s27
      %p36 = scmp.eq.s32.totalorder %s19, 1
      %p37 = por %p35, %p36
      %p38 = scmp.ne.s32.totalorder %s27, %s28
      %p39 = scmp.eq.s32.totalorder %s19, 0
      %p40 = por %p38, %p39
      %p41 = scmp.ne.s32.totalorder %s27, %s28
      %p42 = scmp.eq.s32.totalorder %s20, 1
      %p43 = por %p41, %p42
      %p45 = scmp.ne.s32.totalorder %s28, %s44
      %p46 = scmp.eq.s32.totalorder %s20, 0
      %p47 = por %p45, %p46
      %s48 = ssub.s32 %s14, %s21
      %p49 = scmp.eq.s32.totalorder %s48, 0
      %s51 = sadd.s32 %s50, 1
      %s52 = scalar_select %p49, %s50, %s51
      %p55 = pneg %p49
      %p56 = scmp.eq.s32.totalorder %s14, 1
      %p57 = por %p55, %p56
      %p58 = scmp.ne.s32.totalorder %s50, %s53
      %p59 = scmp.eq.s32.totalorder %s14, 0
      %p60 = por %p58, %p59
      %p61 = scmp.ne.s32.totalorder %s50, %s53
      %p62 = scmp.eq.s32.totalorder %s19, 1
      %p63 = por %p61, %p62
      %p64 = scmp.ne.s32.totalorder %s53, %s54
      %p65 = scmp.eq.s32.totalorder %s19, 0
      %p66 = por %p64, %p65
      %p67 = scmp.ne.s32.totalorder %s53, %s54
      %p68 = scmp.eq.s32.totalorder %s20, 1
      %p69 = por %p67, %p68
      %p71 = scmp.ne.s32.totalorder %s54, %s70
      %p72 = scmp.eq.s32.totalorder %s20, 0
      %p73 = por %p71, %p72
      %s74 = ssub.s32 %s14, %s21
      %p75 = scmp.eq.s32.totalorder %s74, 0
      %s77 = sadd.s32 %s76, 1
      %s78 = scalar_select %p75, %s76, %s77
      %p81 = pneg %p75
      %p82 = scmp.eq.s32.totalorder %s14, 1
      %p83 = por %p81, %p82
      %p84 = scmp.ne.s32.totalorder %s76, %s79
      %p85 = scmp.eq.s32.totalorder %s14, 0
      %p86 = por %p84, %p85
      %p87 = scmp.ne.s32.totalorder %s76, %s79
      %p88 = scmp.eq.s32.totalorder %s19, 1
      %p89 = por %p87, %p88
      %p90 = scmp.ne.s32.totalorder %s79, %s80
      %p91 = scmp.eq.s32.totalorder %s19, 0
      %p92 = por %p90, %p91
      %p93 = scmp.ne.s32.totalorder %s79, %s80
      %p94 = scmp.eq.s32.totalorder %s20, 1
      %p95 = por %p93, %p94
      %p97 = scmp.ne.s32.totalorder %s80, %s96
      %p98 = scmp.eq.s32.totalorder %s20, 0
      %p99 = por %p97, %p98
      %s101 = sadd.s32 %s100, 1
      %p104 = scmp.eq.s32.totalorder %s14, 1
      %p105 = scmp.ne.s32.totalorder %s100, %s102
      %p106 = scmp.eq.s32.totalorder %s14, 0
      %p107 = por %p105, %p106
      %p108 = scmp.ne.s32.totalorder %s100, %s102
      %p109 = scmp.eq.s32.totalorder %s19, 1
      %p110 = por %p108, %p109
      %p111 = scmp.ne.s32.totalorder %s102, %s103
      %p112 = scmp.eq.s32.totalorder %s19, 0
      %p113 = por %p111, %p112
      %p114 = scmp.ne.s32.totalorder %s102, %s103
      %p115 = scmp.eq.s32.totalorder %s20, 1
      %p116 = por %p114, %p115
      %p118 = scmp.ne.s32.totalorder %s103, %s117
      %p119 = scmp.eq.s32.totalorder %s20, 0
      %p120 = por %p118, %p119
      %s122 = sadd.s32 %s121, 1
      %p125 = scmp.eq.s32.totalorder %s14, 1
      %p126 = scmp.ne.s32.totalorder %s121, %s123
      %p127 = scmp.eq.s32.totalorder %s14, 0
      %p128 = por %p126, %p127
      %p129 = scmp.ne.s32.totalorder %s121, %s123
      %p130 = scmp.eq.s32.totalorder %s19, 1
      %p131 = por %p129, %p130
      %p132 = scmp.ne.s32.totalorder %s123, %s124
      %p133 = scmp.eq.s32.totalorder %s19, 0
      %p134 = por %p132, %p133
      %p135 = scmp.ne.s32.totalorder %s123, %s124
      %p136 = scmp.eq.s32.totalorder %s20, 1
      %p137 = por %p135, %p136
      %p139 = scmp.ne.s32.totalorder %s124, %s138
      %p140 = scmp.eq.s32.totalorder %s20, 0
      %p141 = por %p139, %p140
      %s142 = ssub.s32 %s14, %s21
      %p143 = scmp.eq.s32.totalorder %s142, 0
      %s145 = sadd.s32 %s144, 1
      %s146 = scalar_select %p143, %s144, %s145
      %p149 = pneg %p143
      %p150 = scmp.eq.s32.totalorder %s14, 1
      %p151 = por %p149, %p150
      %p152 = scmp.ne.s32.totalorder %s144, %s147
      %p153 = scmp.eq.s32.totalorder %s14, 0
      %p154 = por %p152, %p153
      %p155 = scmp.ne.s32.totalorder %s144, %s147
      %p156 = scmp.eq.s32.totalorder %s19, 1
      %p157 = por %p155, %p156
      %p158 = scmp.ne.s32.totalorder %s147, %s148
      %p159 = scmp.eq.s32.totalorder %s19, 0
      %p160 = por %p158, %p159
      %p161 = scmp.ne.s32.totalorder %s147, %s148
      %p162 = scmp.eq.s32.totalorder %s20, 1
      %p163 = por %p161, %p162
      %p165 = scmp.ne.s32.totalorder %s148, %s164
      %p166 = scmp.eq.s32.totalorder %s20, 0
      %p167 = por %p165, %p166
      %p168 = scmp.le.s32.totalorder 1, %s14
      %p169 = scmp.lt.s32.totalorder %s14, 3
      %p170 = pnand %p168, %p169
      %p171 = pneg %p170
      // Predicated region
      $region9: #{tpu_custom_call.1} parent=5 // pred_check
        _
      $region10: #{tpu_custom_call.1} parent=5 // pred_check_branch
        %173 = sbr.rel (%p170) target = $region12
      $region11: #{tpu_custom_call.1} parent=5 // pred_region
        %s174 = ssub.s32 %s14, 1
        // Predicated region
        $region13: #{tpu_custom_call.1} parent=11 // pred_check
          %p175 = pneg %p113
        $region14: #{tpu_custom_call.1} parent=11 // pred_check_branch
          %177 = sbr.rel (%p175) target = $region16
        $region15: #{tpu_custom_call.1} parent=11 // pred_region
          _
        $region16: #{tpu_custom_call.1} parent=11 // pred_fallthru
          _
        // Predicated region
        $region17: #{tpu_custom_call.1} parent=11 // pred_check
          %p178 = pneg %p134
        $region18: #{tpu_custom_call.1} parent=11 // pred_check_branch
          %180 = sbr.rel (%p178) target = $region20
        $region19: #{tpu_custom_call.1} parent=11 // pred_region
          _
        $region20: #{tpu_custom_call.1} parent=11 // pred_fallthru
          _
      $region12: #{tpu_custom_call.1} parent=5 // pred_fallthru
        _
      %p181 = scmp.lt.s32.totalorder %s14, 2
      // Predicated region
      $region21: #{tpu_custom_call.1} parent=5 // pred_check
        %p182 = pneg %p181
      $region22: #{tpu_custom_call.1} parent=5 // pred_check_branch
        %184 = sbr.rel (%p182) target = $region24
      $region23: #{tpu_custom_call.1} parent=5 // pred_region
        // Predicated region
        $region25: #{tpu_custom_call.1} parent=23 // pred_check
          %p185 = pneg %p34
        $region26: #{tpu_custom_call.1} parent=23 // pred_check_branch
          %187 = sbr.rel (%p185) target = $region28
        $region27: #{tpu_custom_call.1} parent=23 // pred_region
          %p188 = scmp.lt.s32.totalorder %s14, 1
          %s189 = scalar_select %p188, %s14, 1
          %s190 = smul.addr %s189, 2
          %s191 = smul.addr %s190, 8
          %s192 = scalar_lea.vmem %s0, %s191
        $region28: #{tpu_custom_call.1} parent=23 // pred_fallthru
          _
        // Predicated region
        $region29: #{tpu_custom_call.1} parent=23 // pred_check
          %p193 = pneg %p60
        $region30: #{tpu_custom_call.1} parent=23 // pred_check_branch
          %195 = sbr.rel (%p193) target = $region32
        $region31: #{tpu_custom_call.1} parent=23 // pred_region
          %p196 = scmp.lt.s32.totalorder %s14, 1
          %s197 = scalar_select %p196, %s14, 1
          %s198 = smul.addr %s197, 2
          %s199 = smul.addr %s198, 8
          %s200 = scalar_lea.vmem %s1, %s199
        $region32: #{tpu_custom_call.1} parent=23 // pred_fallthru
          _
        // Predicated region
        $region33: #{tpu_custom_call.1} parent=23 // pred_check
          %p201 = pneg %p86
        $region34: #{tpu_custom_call.1} parent=23 // pred_check_branch
          %203 = sbr.rel (%p201) target = $region36
        $region35: #{tpu_custom_call.1} parent=23 // pred_region
          %p204 = scmp.lt.s32.totalorder %s14, 1
          %s205 = scalar_select %p204, %s14, 1
          %s206 = scalar_lea.vmem %s2, %s205
        $region36: #{tpu_custom_call.1} parent=23 // pred_fallthru
          _
      $region24: #{tpu_custom_call.1} parent=5 // pred_fallthru
        _
      %p207 = scmp.le.s32.totalorder 1, %s14
      %p208 = scmp.lt.s32.totalorder %s14, 3
      %p209 = pnand %p207, %p208
      %p210 = pneg %p209
      // Predicated region
      $region37: #{tpu_custom_call.1} parent=5 // pred_check
        _
      $region38: #{tpu_custom_call.1} parent=5 // pred_check_branch
        %212 = sbr.rel (%p209) target = $region40
      $region39: #{tpu_custom_call.1} parent=5 // pred_region
        %s213 = ssub.s32 %s14, 1
        %p214 = scmp.lt.s32.totalorder %s19, 1
        %s215 = scalar_select %p214, %s19, 1
        %s216 = smul.addr %s215, 2
        %s217 = smul.addr %s216, 8
        %s218 = scalar_lea.vmem %s0, %s217
        %p219 = pneg %p40
        %p220 = pneg %p37
        %p221 = scmp.lt.s32.totalorder %s19, 1
        %s222 = scalar_select %p221, %s19, 1
        %s223 = smul.addr %s222, 2
        %s224 = smul.addr %s223, 8
        %s225 = scalar_lea.vmem %s1, %s224
        %p226 = pneg %p66
        %p227 = pneg %p63
        %p228 = scmp.lt.s32.totalorder %s19, 1
        %s229 = scalar_select %p228, %s19, 1
        %s230 = scalar_lea.vmem %s2, %s229
        %p231 = pneg %p92
        %p232 = pneg %p89
        %p233 = pneg %p113
        %p234 = pneg %p110
        %p235 = pneg %p134
        %p236 = pneg %p131
        %p237 = pneg %p160
        %p238 = pneg %p157
        %s239 = sand.u32 %s147, 1
        %s240 = scalar_lea.sflag [#allocation3], %s239
        %s241 = sand.u32 %s147, 1
        %s242 = smul.addr %s241, 16
        %s243 = scalar_lea.vmem [#allocation2], %s242
        %p244 = scmp.lt.s32.totalorder %s19, 1
        %s245 = scalar_select %p244, %s19, 1
        %s246 = smul.addr %s245, 2
        %s247 = smul.addr %s246, 8
        %s248 = scalar_lea.vmem %s0, %s247
        %p249 = scmp.lt.s32.totalorder %s19, 1
        %s250 = scalar_select %p249, %s19, 1
        %s251 = smul.addr %s250, 2
        %s252 = smul.addr %s251, 8
        %s253 = scalar_lea.vmem %s1, %s252
        %p254 = scmp.lt.s32.totalorder %s19, 1
        %s255 = scalar_select %p254, %s19, 1
        %s256 = scalar_lea.vmem %s2, %s255
        %v257 = vld [vmem:[%s3] sm:$0xff]
        %v258 = vld [vmem:[%s4] sm:$0x1]
        %v259 = vld [vmem:[%s248] sm:$0xff]
        %v260 = vld [vmem:[%s248 + $0x8] sm:$0xff]
        %v261 = vld [vmem:[%s253] sm:$0xff]
        %v262 = vld [vmem:[%s253 + $0x8] sm:$0xff]
        %v263 = vld [vmem:[%s256] sm:$0x1]
        %vm264 = vcmask 130048
        %v265 = vsel %vm264, %v261, 0.0
        %v266 = vsel %vm264, %v262, 0.0
        %v267 = vadd.f32 %v265, %v266
        %v268 = vrot.slane %v267, 4
        %v269 = vadd.f32 %v267, %v268
        %v270 = vrot.slane %v269, 2
        %v271 = vadd.f32 %v269, %v270
        %v272 = vrot.slane %v271, 1
        %v273 = vadd.f32 %v271, %v272
        %v274 = vadd.f32 %v273, 1.0
        %v275 = vadd.f32 %v274, 1e-05
        %v276 = vrsqrt.pop %v275
        %277 = vxpose.xlu0.b32.start [1/16] %v276, 128
        %278 = vxpose.xlu0.b32.cont [2/16] 0.0, 128
        %279 = vxpose.xlu0.b32.cont [3/16] 0.0, 128
        %280 = vxpose.xlu0.b32.cont [4/16] 0.0, 128
        %281 = vxpose.xlu0.b32.cont [5/16] 0.0, 128
        %282 = vxpose.xlu0.b32.cont [6/16] 0.0, 128
        %283 = vxpose.xlu0.b32.cont [7/16] 0.0, 128
        %284 = vxpose.xlu0.b32.cont [8/16] 0.0, 128
        %285 = vxpose.xlu0.b32.cont [9/16] 0.0, 128
        %286 = vxpose.xlu0.b32.cont [10/16] 0.0, 128
        %287 = vxpose.xlu0.b32.cont [11/16] 0.0, 128
        %288 = vxpose.xlu0.b32.cont [12/16] 0.0, 128
        %289 = vxpose.xlu0.b32.cont [13/16] 0.0, 128
        %290 = vxpose.xlu0.b32.cont [14/16] 0.0, 128
        %291 = vxpose.xlu0.b32.cont [15/16] 0.0, 128
        %292 = vxpose.xlu0.b32.end [16/16] 0.0, 128
        %v293 = vpop.trf.xlu0
        %v294 = vpop.trf.xlu0
        %v295 = vpop.trf.xlu0
        %v296 = vpop.trf.xlu0
        %v297 = vpop.trf.xlu0
        %v298 = vpop.trf.xlu0
        %v299 = vpop.trf.xlu0
        %v300 = vpop.trf.xlu0
        %v301 = vpop.trf.xlu0
        %v302 = vpop.trf.xlu0
        %v303 = vpop.trf.xlu0
        %v304 = vpop.trf.xlu0
        %v305 = vpop.trf.xlu0
        %v306 = vpop.trf.xlu0
        %v307 = vpop.trf.xlu0
        %v308 = vpop.trf.xlu0
        %309 = vxpose.xlu0.b32.start [1/16] %v263, 128
        %310 = vxpose.xlu0.b32.cont [2/16] 0.0, 128
        %311 = vxpose.xlu0.b32.cont [3/16] 0.0, 128
        %312 = vxpose.xlu0.b32.cont [4/16] 0.0, 128
        %313 = vxpose.xlu0.b32.cont [5/16] 0.0, 128
        %314 = vxpose.xlu0.b32.cont [6/16] 0.0, 128
        %315 = vxpose.xlu0.b32.cont [7/16] 0.0, 128
        %316 = vxpose.xlu0.b32.cont [8/16] 0.0, 128
        %317 = vxpose.xlu0.b32.cont [9/16] 0.0, 128
        %318 = vxpose.xlu0.b32.cont [10/16] 0.0, 128
        %319 = vxpose.xlu0.b32.cont [11/16] 0.0, 128
        %320 = vxpose.xlu0.b32.cont [12/16] 0.0, 128
        %321 = vxpose.xlu0.b32.cont [13/16] 0.0, 128
        %322 = vxpose.xlu0.b32.cont [14/16] 0.0, 128
        %323 = vxpose.xlu0.b32.cont [15/16] 0.0, 128
        %324 = vxpose.xlu0.b32.end [16/16] 0.0, 128
        %v325 = vpop.trf.xlu0
        %v326 = vpop.trf.xlu0
        %v327 = vpop.trf.xlu0
        %v328 = vpop.trf.xlu0
        %v329 = vpop.trf.xlu0
        %v330 = vpop.trf.xlu0
        %v331 = vpop.trf.xlu0
        %v332 = vpop.trf.xlu0
        %v333 = vpop.trf.xlu0
        %v334 = vpop.trf.xlu0
        %v335 = vpop.trf.xlu0
        %v336 = vpop.trf.xlu0
        %v337 = vpop.trf.xlu0
        %v338 = vpop.trf.xlu0
        %v339 = vpop.trf.xlu0
        %v340 = vpop.trf.xlu0
        %342 = vset.pattern.permute.xlu0 0
        %343 = vperm.xlu0 %342, %v293
        %v344 = vpop.permute.xlu0 %343
        %347 = vset.pattern.permute.xlu0 0
        %348 = vperm.xlu0 %347, %v294
        %v349 = vpop.permute.xlu0 %348
        %v351 = vmul.f32 %v344, %v259
        %v352 = vmul.f32 %v349, %v260
        %v354 = vsel %vm264, %v261, 0
        %v357 = vsel %vm264, %v262, 0
        %359 = vmatprep.subr.mxu0 0.0
        %360 = vmatpush1.msra.mxu0 %v351
        %361 = vmatprep.subr.mxu0 0.0
        %362 = vmatpush1.msra.mxu0 %v352
        %363 = vmatprep.subr.mxu0 0.0
        %364 = vmatpush1.msra.mxu0 0.0
        %365 = vmatprep.subr.mxu0 0.0
        %366 = vmatpush1.msra.mxu0 0.0
        %367 = vmatprep.subr.mxu0 0.0
        %368 = vmatpush1.msra.mxu0 0.0
        %369 = vmatprep.subr.mxu0 0.0
        %370 = vmatpush1.msra.mxu0 0.0
        %371 = vmatprep.subr.mxu0 0.0
        %372 = vmatpush1.msra.mxu0 0.0
        %373 = vmatprep.subr.mxu0 0.0
        %374 = vmatpush1.msra.mxu0 0.0
        %375 = vmatprep.subr.mxu0 0.0
        %376 = vmatpush1.msra.mxu0 0.0
        %377 = vmatprep.subr.mxu0 0.0
        %378 = vmatpush1.msra.mxu0 0.0
        %379 = vmatprep.subr.mxu0 0.0
        %380 = vmatpush1.msra.mxu0 0.0
        %381 = vmatprep.subr.mxu0 0.0
        %382 = vmatpush1.msra.mxu0 0.0
        %383 = vmatprep.subr.mxu0 0.0
        %384 = vmatpush1.msra.mxu0 0.0
        %385 = vmatprep.subr.mxu0 0.0
        %386 = vmatpush1.msra.mxu0 0.0
        %387 = vmatprep.subr.mxu0 0.0
        %388 = vmatpush1.msra.mxu0 0.0
        %389 = vmatprep.subr.mxu0 0.0
        %390 = vmatpush1.msra.mxu0 0.0
        %391 = vmatprep.subr.mxu0 0.0
        %392 = vmatpush1.msra.mxu0 0.0
        %393 = vmatprep.subr.mxu0 0.0
        %394 = vmatpush1.msra.mxu0 0.0
        %395 = vmatprep.subr.mxu0 0.0
        %396 = vmatpush1.msra.mxu0 0.0
        %397 = vmatprep.subr.mxu0 0.0
        %398 = vmatpush1.msra.mxu0 0.0
        %399 = vmatprep.subr.mxu0 0.0
        %400 = vmatpush1.msra.mxu0 0.0
        %401 = vmatprep.subr.mxu0 0.0
        %402 = vmatpush1.msra.mxu0 0.0
        %403 = vmatprep.subr.mxu0 0.0
        %404 = vmatpush1.msra.mxu0 0.0
        %405 = vmatprep.subr.mxu0 0.0
        %406 = vmatpush1.msra.mxu0 0.0
        %407 = vmatprep.subr.mxu0 0.0
        %408 = vmatpush1.msra.mxu0 0.0
        %409 = vmatprep.subr.mxu0 0.0
        %410 = vmatpush1.msra.mxu0 0.0
        %411 = vmatprep.subr.mxu0 0.0
        %412 = vmatpush1.msra.mxu0 0.0
        %413 = vmatprep.subr.mxu0 0.0
        %414 = vmatpush1.msra.mxu0 0.0
        %415 = vmatprep.subr.mxu0 0.0
        %416 = vmatpush1.msra.mxu0 0.0
        %417 = vmatprep.subr.mxu0 0.0
        %418 = vmatpush1.msra.mxu0 0.0
        %419 = vmatprep.subr.mxu0 0.0
        %420 = vmatpush1.msra.mxu0 0.0
        %421 = vmatprep.subr.mxu0 0.0
        %422 = vmatpush1.msra.mxu0 0.0
        %423 = vmatprep.mubr.f32.mxu0 0.0
        %424 = vmatmul.mubr.f32.gmra.mrb[0].mxu0 %v354
        %v425 = vpop.f32.mrb[0].mxu0
        %v426 = vadd.f32 %v351, %v425
        %v427 = vpop.f32.mrb[0].mxu0
        %428 = vmatprep.mubr.f32.mxu0 0.0
        %429 = vmatmul.mubr.f32.gmra.mrb[0].mxu0 %v357
        %v430 = vpop.f32.mrb[0].mxu0
        %v431 = vadd.f32 %v352, %v430
        %v432 = vpop.f32.mrb[0].mxu0
        %433 = vdwg.mxu0
        %v434 = vmul.f32 %v344, %v426
        %v435 = vmul.f32 %v349, %v431
        %v437 = vlaneseq
        %v438 = vshrl.u32 %v437, 7
        %v439 = vsub.s32 0, %v438
        %v440 = vrot.slane %v258, %v439
        %vm442 = vcmask 64512
        %v444 = vsel %vm442, %v434, 0
        %v447 = vsel %vm442, %v435, 0
        %449 = vmatprep.subr.mxu0 0.0
        %450 = vmatpush1.msra.mxu0 %v257
        %451 = vmatprep.subr.mxu0 0.0
        %452 = vmatpush1.msra.mxu0 0.0
        %453 = vmatprep.subr.mxu0 0.0
        %454 = vmatpush1.msra.mxu0 0.0
        %455 = vmatprep.subr.mxu0 0.0
        %456 = vmatpush1.msra.mxu0 0.0
        %457 = vmatprep.subr.mxu0 0.0
        %458 = vmatpush1.msra.mxu0 0.0
        %459 = vmatprep.subr.mxu0 0.0
        %460 = vmatpush1.msra.mxu0 0.0
        %461 = vmatprep.subr.mxu0 0.0
        %462 = vmatpush1.msra.mxu0 0.0
        %463 = vmatprep.subr.mxu0 0.0
        %464 = vmatpush1.msra.mxu0 0.0
        %465 = vmatprep.subr.mxu0 0.0
        %466 = vmatpush1.msra.mxu0 0.0
        %467 = vmatprep.subr.mxu0 0.0
        %468 = vmatpush1.msra.mxu0 0.0
        %469 = vmatprep.subr.mxu0 0.0
        %470 = vmatpush1.msra.mxu0 0.0
        %471 = vmatprep.subr.mxu0 0.0
        %472 = vmatpush1.msra.mxu0 0.0
        %473 = vmatprep.subr.mxu0 0.0
        %474 = vmatpush1.msra.mxu0 0.0
        %475 = vmatprep.subr.mxu0 0.0
        %476 = vmatpush1.msra.mxu0 0.0
        %477 = vmatprep.subr.mxu0 0.0
        %478 = vmatpush1.msra.mxu0 0.0
        %479 = vmatprep.subr.mxu0 0.0
        %480 = vmatpush1.msra.mxu0 0.0
        %481 = vmatprep.subr.mxu0 0.0
        %482 = vmatpush1.msra.mxu0 0.0
        %483 = vmatprep.subr.mxu0 0.0
        %484 = vmatpush1.msra.mxu0 0.0
        %485 = vmatprep.subr.mxu0 0.0
        %486 = vmatpush1.msra.mxu0 0.0
        %487 = vmatprep.subr.mxu0 0.0
        %488 = vmatpush1.msra.mxu0 0.0
        %489 = vmatprep.subr.mxu0 0.0
        %490 = vmatpush1.msra.mxu0 0.0
        %491 = vmatprep.subr.mxu0 0.0
        %492 = vmatpush1.msra.mxu0 0.0
        %493 = vmatprep.subr.mxu0 0.0
        %494 = vmatpush1.msra.mxu0 0.0
        %495 = vmatprep.subr.mxu0 0.0
        %496 = vmatpush1.msra.mxu0 0.0
        %497 = vmatprep.subr.mxu0 0.0
        %498 = vmatpush1.msra.mxu0 0.0
        %499 = vmatprep.subr.mxu0 0.0
        %500 = vmatpush1.msra.mxu0 0.0
        %501 = vmatprep.subr.mxu0 0.0
        %502 = vmatpush1.msra.mxu0 0.0
        %503 = vmatprep.subr.mxu0 0.0
        %504 = vmatpush1.msra.mxu0 0.0
        %505 = vmatprep.subr.mxu0 0.0
        %506 = vmatpush1.msra.mxu0 0.0
        %507 = vmatprep.subr.mxu0 0.0
        %508 = vmatpush1.msra.mxu0 0.0
        %509 = vmatprep.subr.mxu0 0.0
        %510 = vmatpush1.msra.mxu0 0.0
        %511 = vmatprep.subr.mxu0 0.0
        %512 = vmatpush1.msra.mxu0 0.0
        %513 = vmatprep.mubr.f32.mxu0 0.0
        %514 = vmatmul.mubr.f32.gmra.mrb[0].mxu0 %v444
        %v515 = vpop.f32.mrb[0].mxu0
        %v516 = vadd.f32 %v440, %v515
        %v517 = vpop.f32.mrb[0].mxu0
        %518 = vmatprep.mubr.f32.mxu0 0.0
        %519 = vmatmul.mubr.f32.gmra.mrb[0].mxu0 %v447
        %v520 = vpop.f32.mrb[0].mxu0
        %v521 = vadd.f32 %v440, %v520
        %v522 = vpop.f32.mrb[0].mxu0
        %523 = vdwg.mxu0
        %525 = vset.pattern.permute.xlu0 0
        %526 = vperm.xlu0 %525, %v325
        %v527 = vpop.permute.xlu0 %526
        %530 = vset.pattern.permute.xlu0 0
        %531 = vperm.xlu0 %530, %v326
        %v532 = vpop.permute.xlu0 %531
        %v534 = vmul.f32 %v516, %v527
        %v535 = vmul.f32 %v521, %v532
        %536 = vst [vmem:[%s243] sm:$0xff] %v534
        %537 = vst [vmem:[%s243 + $0x8] sm:$0xff] %v535
        %s538 = sand.u32 %s147, 1
        %s539 = scalar_lea.sflag [#allocation3], %s538
        %s540 = sand.u32 %s147, 1
        %s541 = smul.addr %s540, 16
        %s542 = scalar_lea.vmem [#allocation2], %s541
        // Predicated region
        $region41: #{tpu_custom_call.1} parent=39 // pred_check
          %p543 = pneg %p157
        $region42: #{tpu_custom_call.1} parent=39 // pred_check_branch
          %545 = sbr.rel (%p543) target = $region44
        $region43: #{tpu_custom_call.1} parent=39 // pred_region
          %s547 = ssub.s32 256, 256
          %548 = vsyncadd %s539, %s547
          %s549 = smul.addr %s19, 2
          %s550 = smul.addr %s549, 128
          %s551 = scalar_lea.hbm %s5, %s550
          %s552 = sshll.u32 %s542, 4
          %s553 = int_to_ptr.vmem [resolvable:$true] %s552
          %558 = dma.vmem_to_hbm [thread:$0]  %s553, 256, %s551, %s539, 128, 128, 8
        $region44: #{tpu_custom_call.1} parent=39 // pred_fallthru
          _
      $region40: #{tpu_custom_call.1} parent=5 // pred_fallthru
        _
      %p559 = scmp.le.s32.totalorder 2, %s14
      // Predicated region
      $region45: #{tpu_custom_call.1} parent=5 // pred_check
        %p560 = pneg %p559
      $region46: #{tpu_custom_call.1} parent=5 // pred_check_branch
        %562 = sbr.rel (%p560) target = $region48
      $region47: #{tpu_custom_call.1} parent=5 // pred_region
        %s563 = ssub.s32 %s14, 2
        // Predicated region
        $region49: #{tpu_custom_call.1} parent=47 // pred_check
          %p564 = pneg %p163
        $region50: #{tpu_custom_call.1} parent=47 // pred_check_branch
          %566 = sbr.rel (%p564) target = $region52
        $region51: #{tpu_custom_call.1} parent=47 // pred_region
          %s567 = sand.u32 %s148, 1
          %s568 = scalar_lea.sflag [#allocation3], %s567
          %s569 = sand.u32 %s148, 1
          %s570 = smul.addr %s569, 16
          %s571 = scalar_lea.vmem [#allocation2], %s570
          %572 = dma.done %s568, 256
        $region52: #{tpu_custom_call.1} parent=47 // pred_fallthru
          _
      $region48: #{tpu_custom_call.1} parent=5 // pred_fallthru
        _
    $region6: #{tpu_custom_call.1} parent=1 // loop_footer
      %s18 = sadd.s32 1, %s14
    $region7: #{tpu_custom_call.1} parent=1 // loop_footer_branch
      %13 = sbr.rel target = $region3
    $region8: #{tpu_custom_call.1} parent=1 // loop_exit
      _
    %573 = vsyncpa [#allocation3], 1
    %s574 = scalar_lea.sflag [#allocation3], 1
    %575 = vsyncpa %s574, 1

</llo_original>
